<compile_context>
chip_gen: v5e
topology: v5e:2x2
jax: 0.10.0
libtpu: 0.0.40
codegen_flags: <defaults>
</compile_context>

<pallas_src>
import jax
import jax.numpy as jnp
from jax import lax
from jax.experimental import pallas as pl
from jax.experimental.pallas import tpu as pltpu


def _round_up(n, m):
    return ((n + m - 1) // m) * m


# ---------------------------------------------------------------------------
# Fused kernel: all RNN layers + final FC, one VMEM-resident invocation.
# Argument order:  x_flat, h0, [W_ih, W_hh, bias] * n_layers, W_fc, b_fc,
#                  out_flat, h_out, pre_scratch, cur_scratch
# ---------------------------------------------------------------------------
def _make_fused_kernel(n_layers, seq, bp):
    def kernel(*refs):
        x_ref = refs[0]                        # (seq*bp, emb)          bf16
        h0_ref = refs[1]                       # (n_layers, bp, hidden) f32
        layer_refs = refs[2:2 + 3 * n_layers]
        wfc_ref = refs[2 + 3 * n_layers]       # (hidden, out_pad)      bf16
        bfc_ref = refs[3 + 3 * n_layers]       # (1, out_pad)           f32
        out_ref = refs[4 + 3 * n_layers]       # (seq*bp, out_pad)      f32
        hout_ref = refs[5 + 3 * n_layers]      # (n_layers, bp, hidden) f32
        pre_ref = refs[6 + 3 * n_layers]       # (seq*bp, hidden) f32 scratch
        cur_ref = refs[7 + 3 * n_layers]       # (seq*bp, hidden) f32 scratch

        for layer in range(n_layers):
            wih = layer_refs[3 * layer][...]        # (in_dim, hidden)  bf16
            whh = layer_refs[3 * layer + 1][...]    # (hidden, hidden)  f32
            bias = layer_refs[3 * layer + 2][...]   # (1, hidden) f32 == b_ih+b_hh

            # Hoisted input projection for the whole sequence: one bf16 GEMM,
            # f32 accumulation, written straight into VMEM scratch.
            src = x_ref[...] if layer == 0 else cur_ref[...].astype(jnp.bfloat16)
            pre_ref[...] = (jnp.dot(src, wih, preferred_element_type=jnp.float32)
                            + bias)

            # Serial recurrence: h @ W_hh + pre[t] -> tanh; per-step pl.ds store
            # into scratch (no concatenate, live ranges stay bounded).
            def step(t, h):
                off = pl.multiple_of(t * bp, bp)
                h = jnp.tanh(pre_ref[pl.ds(off, bp), :]
                             + jnp.dot(h, whh,
                                       preferred_element_type=jnp.float32))
                cur_ref[pl.ds(off, bp), :] = h
                return h

            h = h0_ref[layer]                       # (bp, hidden)
            if seq <= 16:
                for t in range(seq):                # small static trip count
                    h = step(t, h)
            else:
                h = lax.fori_loop(0, seq, step, h, unroll=4)
            hout_ref[layer] = h                     # final hidden of this layer

        # Final Linear over the whole flattened sequence, lane-dense 128 wide.
        out_ref[...] = (jnp.dot(cur_ref[...].astype(jnp.bfloat16), wfc_ref[...],
                                preferred_element_type=jnp.float32)
                        + bfc_ref[...])
    return kernel


def _fused_forward(x, h0, w_ih, w_hh, b_sum, w_fc, b_fc):
    """x: (batch, seq, emb) f32; h0: (n_layers, batch, hidden) f32.
    w_ih/w_hh/b_sum: tuples of per-layer params (pre-transposed / pre-summed).
    Returns (out (batch, seq, out_dim), h (n_layers, batch, hidden))."""
    batch, seq, emb = x.shape
    n_layers, _, hidden = h0.shape
    out_dim = w_fc.shape[-1]
    bp = _round_up(batch, 8)            # sublane-align per-step row blocks
    out_pad = _round_up(out_dim, 128)   # lane-dense FC output store

    # time-major, batch padded to bp, flattened to (seq*bp, emb), bf16 operand
    x_tm = jnp.transpose(x, (1, 0, 2)).astype(jnp.float32)
    x_tm = jnp.pad(x_tm, ((0, 0), (0, bp - batch), (0, 0)))
    x_flat = x_tm.reshape(seq * bp, emb).astype(jnp.bfloat16)
    h0p = jnp.pad(h0.astype(jnp.float32), ((0, 0), (0, bp - batch), (0, 0)))

    args = [x_flat, h0p]
    for layer in range(n_layers):
        args += [w_ih[layer].astype(jnp.bfloat16),          # MXU operand
                 w_hh[layer].astype(jnp.float32),            # recurrence stays f32
                 b_sum[layer].reshape(1, -1).astype(jnp.float32)]
    w_fc_p = jnp.pad(w_fc, ((0, 0), (0, out_pad - out_dim))).astype(jnp.bfloat16)
    b_fc_p = jnp.pad(b_fc.reshape(1, -1),
                     ((0, 0), (0, out_pad - out_dim))).astype(jnp.float32)
    args += [w_fc_p, b_fc_p]

    # Advisory cost estimate: hoisted GEMMs + recurrence dots + FC GEMM + tanh.
    flops = 0
    for layer in range(n_layers):
        in_dim = emb if layer == 0 else hidden
        flops += 2 * seq * bp * in_dim * hidden       # hoisted input projection
        flops += seq * 2 * bp * hidden * hidden       # recurrence dots
    flops += 2 * seq * bp * hidden * out_pad          # final Linear
    bytes_accessed = (sum(int(a.size) * a.dtype.itemsize for a in args)
                      + seq * bp * out_pad * 4 + n_layers * bp * hidden * 4)
    cost = pl.CostEstimate(flops=flops,
                           transcendentals=n_layers * seq * bp * hidden,
                           bytes_accessed=bytes_accessed)

    vmem = pl.BlockSpec(memory_space=pltpu.MemorySpace.VMEM)
    out_flat, h_out = pl.pallas_call(
        _make_fused_kernel(n_layers, seq, bp),
        out_shape=(jax.ShapeDtypeStruct((seq * bp, out_pad), jnp.float32),
                   jax.ShapeDtypeStruct((n_layers, bp, hidden), jnp.float32)),
        in_specs=[vmem] * len(args),
        out_specs=(vmem, vmem),
        scratch_shapes=[pltpu.VMEM((seq * bp, hidden), jnp.float32),   # pre
                        pltpu.VMEM((seq * bp, hidden), jnp.float32)],  # cur
        compiler_params=pltpu.CompilerParams(vmem_limit_bytes=32 * 1024 * 1024),
        cost_estimate=cost,
    )(*args)

    out = out_flat.reshape(seq, bp, out_pad)[:, :batch, :out_dim]   # drop padding
    out = jnp.transpose(out, (1, 0, 2))                             # batch_first
    h_new = h_out[:, :batch]
    return out, h_new


_fused_forward_jit = jax.jit(_fused_forward)


# ---------------------------------------------------------------------------
# Module wrapper with deterministic parameter init (matches nn.RNN/nn.Linear
# shapes; uniform(-1/sqrt(hidden), 1/sqrt(hidden)) like PyTorch's default).
# ---------------------------------------------------------------------------
class PallasRNN:
    def __init__(self, input_dim, embedding_dim, hidden_dim, output_dim,
                 n_layers, key):
        self.hidden_dim = hidden_dim
        self.n_layers = n_layers
        k = 1.0 / jnp.sqrt(hidden_dim)
        keys = jax.random.split(key, 4 * n_layers + 3)
        ki = iter(range(len(keys)))

        # embedding table exists in the PyTorch module but is unused in forward
        # (forward does `emb = x`); kept for shape parity.
        self.embedding = jax.random.normal(
            keys[next(ki)], (input_dim, embedding_dim), jnp.float32)

        self.w_ih, self.w_hh, self.b_ih, self.b_hh = [], [], [], []
        for layer in range(n_layers):
            in_dim = embedding_dim if layer == 0 else hidden_dim
            self.w_ih.append(jax.random.uniform(
                keys[next(ki)], (in_dim, hidden_dim), jnp.float32, -k, k))
            self.w_hh.append(jax.random.uniform(
                keys[next(ki)], (hidden_dim, hidden_dim), jnp.float32, -k, k))
            self.b_ih.append(jax.random.uniform(
                keys[next(ki)], (hidden_dim,), jnp.float32, -k, k))
            self.b_hh.append(jax.random.uniform(
                keys[next(ki)], (hidden_dim,), jnp.float32, -k, k))

        self.w_fc = jax.random.uniform(
            keys[next(ki)], (hidden_dim, output_dim), jnp.float32, -k, k)
        self.b_fc = jax.random.uniform(
            keys[next(ki)], (output_dim,), jnp.float32, -k, k)

    def init_hidden(self, batch_size):
        return (jnp.zeros((self.n_layers, batch_size, self.hidden_dim),
                          jnp.float32), None)

    def forward(self, x, h, c=None):
        # x: (batch, seq, emb_dim), h: (n_layers, batch, hidden)
        b_sum = tuple(bi + bh for bi, bh in zip(self.b_ih, self.b_hh))
        out, h_new = _fused_forward_jit(
            x.astype(jnp.float32), h.astype(jnp.float32),
            tuple(self.w_ih), tuple(self.w_hh), b_sum, self.w_fc, self.b_fc)
        return out, h_new, None


# ---------------------------------------------------------------------------
# Pure-JAX f32 reference (mirrors torch.nn.RNN + Linear) for correctness check.
# ---------------------------------------------------------------------------
def reference_forward(model, x, h0):
    inp = jnp.transpose(x, (1, 0, 2))
    h_finals = []
    for layer in range(model.n_layers):
        h = h0[layer]
        outs = []
        for t in range(inp.shape[0]):
            h = jnp.tanh(inp[t] @ model.w_ih[layer] + model.b_ih[layer]
                         + h @ model.w_hh[layer] + model.b_hh[layer])
            outs.append(h)
        inp = jnp.stack(outs, axis=0)
        h_finals.append(h)
    out = inp @ model.w_fc + model.b_fc
    return jnp.transpose(out, (1, 0, 2)), jnp.stack(h_finals, axis=0)


if __name__ == "__main__":
    input_dim, embedding_dim, hidden_dim, output_dim, n_layers = 50, 16, 32, 8, 2
    batch, seq = 2, 8

    key = jax.random.PRNGKey(0)
    k_model, k_x = jax.random.split(key)
    model = PallasRNN(input_dim, embedding_dim, hidden_dim, output_dim,
                      n_layers, k_model)

    # forward takes already-embedded inputs (emb = x in the PyTorch module)
    x = jax.random.normal(k_x, (batch, seq, embedding_dim), jnp.float32)
    h0, c0 = model.init_hidden(batch)

    out, h, c = model.forward(x, h0, c0)
    out = jax.block_until_ready(out)
    h = jax.block_until_ready(h)
    assert c is None
    assert out.shape == (batch, seq, output_dim)
    assert h.shape == (n_layers, batch, hidden_dim)

    # bf16 MXU operands with f32 accumulation -> tolerance loosened vs f32 ref.
    ref_out, ref_h = reference_forward(model, x, h0)
    assert jnp.allclose(out, ref_out, atol=5e-2, rtol=5e-2), \
        float(jnp.max(jnp.abs(out - ref_out)))
    assert jnp.allclose(h, ref_h, atol=5e-2, rtol=5e-2), \
        float(jnp.max(jnp.abs(h - ref_h)))

    print("KERNEL_OK")
</pallas_src>

<mosaic_0001>
module attributes {stable_mosaic.version = 11 : i64} {
  func.func @kernel(%arg0: memref<64x16xbf16, #tpu.memory_space<vmem>>, %arg1: memref<2x8x32xf32, #tpu.memory_space<vmem>>, %arg2: memref<16x32xbf16, #tpu.memory_space<vmem>>, %arg3: memref<32x32xf32, #tpu.memory_space<vmem>>, %arg4: memref<1x32xf32, #tpu.memory_space<vmem>>, %arg5: memref<32x32xbf16, #tpu.memory_space<vmem>>, %arg6: memref<32x32xf32, #tpu.memory_space<vmem>>, %arg7: memref<1x32xf32, #tpu.memory_space<vmem>>, %arg8: memref<32x128xbf16, #tpu.memory_space<vmem>>, %arg9: memref<1x128xf32, #tpu.memory_space<vmem>>, %arg10: memref<64x128xf32, #tpu.memory_space<vmem>>, %arg11: memref<2x8x32xf32, #tpu.memory_space<vmem>>, %arg12: memref<64x32xf32, #tpu.memory_space<vmem>>, %arg13: memref<64x32xf32, #tpu.memory_space<vmem>>) attributes {dimension_semantics = [], scalar_prefetch = 0 : i64, scratch_operands = 2 : i64, tpu.core_type = #tpu.core_type<tc>} {
    %c0 = arith.constant 0 : index
    %c0_0 = arith.constant 0 : index
    %0 = vector.load %arg2[%c0, %c0_0] : memref<16x32xbf16, #tpu.memory_space<vmem>>, vector<16x32xbf16>
    %c0_1 = arith.constant 0 : index
    %c0_2 = arith.constant 0 : index
    %1 = vector.load %arg3[%c0_1, %c0_2] : memref<32x32xf32, #tpu.memory_space<vmem>>, vector<32x32xf32>
    %c0_3 = arith.constant 0 : index
    %c0_4 = arith.constant 0 : index
    %2 = vector.load %arg4[%c0_3, %c0_4] : memref<1x32xf32, #tpu.memory_space<vmem>>, vector<1x32xf32>
    %c0_5 = arith.constant 0 : index
    %c0_6 = arith.constant 0 : index
    %3 = vector.load %arg0[%c0_5, %c0_6] : memref<64x16xbf16, #tpu.memory_space<vmem>>, vector<64x16xbf16>
    %cst = arith.constant dense<0.000000e+00> : vector<64x32xf32>
    %4 = tpu.matmul %3, %0, %cst {dimension_numbers = #tpu.dot_dimension_numbers<[1], [0], [0], [1], [0, 0, 1, 1], [], []>} : vector<64x16xbf16>, vector<16x32xbf16>, vector<64x32xf32> -> vector<64x32xf32>
    %5 = vector.broadcast %2 : vector<1x32xf32> to vector<64x32xf32>
    %6 = arith.addf %4, %5 : vector<64x32xf32>
    %c0_7 = arith.constant 0 : index
    %c0_8 = arith.constant 0 : index
    %7 = vector.load %arg12[%c0_7, %c0_8] : memref<64x32xf32, #tpu.memory_space<vmem>>, vector<64x32xf32>
    tpu.vector_store %arg12[%c0_7, %c0_8], %6 {strides = array<i32>} : memref<64x32xf32, #tpu.memory_space<vmem>>, vector<64x32xf32>,
    %c0_9 = arith.constant 0 : index
    %c0_10 = arith.constant 0 : index
    %c0_11 = arith.constant 0 : index
    %8 = vector.load %arg1[%c0_9, %c0_10, %c0_11] : memref<2x8x32xf32, #tpu.memory_space<vmem>>, vector<1x8x32xf32>
    %9 = vector.shape_cast %8 : vector<1x8x32xf32> to vector<8x32xf32>
    %c0_i32 = arith.constant 0 : i32
    %10 = tpu.assume_multiple %c0_i32, 8 : i32
    %11 = arith.index_cast %10 : i32 to index
    %c0_12 = arith.constant 0 : index
    %12 = vector.load %arg12[%11, %c0_12] : memref<64x32xf32, #tpu.memory_space<vmem>>, vector<8x32xf32>
    %cst_13 = arith.constant dense<0.000000e+00> : vector<8x32xf32>
    %13 = tpu.matmul %9, %1, %cst_13 {dimension_numbers = #tpu.dot_dimension_numbers<[1], [0], [0], [1], [0, 0, 1, 1], [], []>} : vector<8x32xf32>, vector<32x32xf32>, vector<8x32xf32> -> vector<8x32xf32>
    %14 = arith.addf %12, %13 : vector<8x32xf32>
    %15 = math.tanh %14 : vector<8x32xf32>
    %16 = arith.index_cast %10 : i32 to index
    %c0_14 = arith.constant 0 : index
    %17 = vector.load %arg13[%16, %c0_14] : memref<64x32xf32, #tpu.memory_space<vmem>>, vector<8x32xf32>
    tpu.vector_store %arg13[%16, %c0_14], %15 {strides = array<i32>} : memref<64x32xf32, #tpu.memory_space<vmem>>, vector<8x32xf32>,
    %c8_i32 = arith.constant 8 : i32
    %18 = tpu.assume_multiple %c8_i32, 8 : i32
    %19 = arith.index_cast %18 : i32 to index
    %c0_15 = arith.constant 0 : index
    %20 = vector.load %arg12[%19, %c0_15] : memref<64x32xf32, #tpu.memory_space<vmem>>, vector<8x32xf32>
    %cst_16 = arith.constant dense<0.000000e+00> : vector<8x32xf32>
    %21 = tpu.matmul %15, %1, %cst_16 {dimension_numbers = #tpu.dot_dimension_numbers<[1], [0], [0], [1], [0, 0, 1, 1], [], []>} : vector<8x32xf32>, vector<32x32xf32>, vector<8x32xf32> -> vector<8x32xf32>
    %22 = arith.addf %20, %21 : vector<8x32xf32>
    %23 = math.tanh %22 : vector<8x32xf32>
    %24 = arith.index_cast %18 : i32 to index
    %c0_17 = arith.constant 0 : index
    %25 = vector.load %arg13[%24, %c0_17] : memref<64x32xf32, #tpu.memory_space<vmem>>, vector<8x32xf32>
    tpu.vector_store %arg13[%24, %c0_17], %23 {strides = array<i32>} : memref<64x32xf32, #tpu.memory_space<vmem>>, vector<8x32xf32>,
    %c16_i32 = arith.constant 16 : i32
    %26 = tpu.assume_multiple %c16_i32, 8 : i32
    %27 = arith.index_cast %26 : i32 to index
    %c0_18 = arith.constant 0 : index
    %28 = vector.load %arg12[%27, %c0_18] : memref<64x32xf32, #tpu.memory_space<vmem>>, vector<8x32xf32>
    %cst_19 = arith.constant dense<0.000000e+00> : vector<8x32xf32>
    %29 = tpu.matmul %23, %1, %cst_19 {dimension_numbers = #tpu.dot_dimension_numbers<[1], [0], [0], [1], [0, 0, 1, 1], [], []>} : vector<8x32xf32>, vector<32x32xf32>, vector<8x32xf32> -> vector<8x32xf32>
    %30 = arith.addf %28, %29 : vector<8x32xf32>
    %31 = math.tanh %30 : vector<8x32xf32>
    %32 = arith.index_cast %26 : i32 to index
    %c0_20 = arith.constant 0 : index
    %33 = vector.load %arg13[%32, %c0_20] : memref<64x32xf32, #tpu.memory_space<vmem>>, vector<8x32xf32>
    tpu.vector_store %arg13[%32, %c0_20], %31 {strides = array<i32>} : memref<64x32xf32, #tpu.memory_space<vmem>>, vector<8x32xf32>,
    %c24_i32 = arith.constant 24 : i32
    %34 = tpu.assume_multiple %c24_i32, 8 : i32
    %35 = arith.index_cast %34 : i32 to index
    %c0_21 = arith.constant 0 : index
    %36 = vector.load %arg12[%35, %c0_21] : memref<64x32xf32, #tpu.memory_space<vmem>>, vector<8x32xf32>
    %cst_22 = arith.constant dense<0.000000e+00> : vector<8x32xf32>
    %37 = tpu.matmul %31, %1, %cst_22 {dimension_numbers = #tpu.dot_dimension_numbers<[1], [0], [0], [1], [0, 0, 1, 1], [], []>} : vector<8x32xf32>, vector<32x32xf32>, vector<8x32xf32> -> vector<8x32xf32>
    %38 = arith.addf %36, %37 : vector<8x32xf32>
    %39 = math.tanh %38 : vector<8x32xf32>
    %40 = arith.index_cast %34 : i32 to index
    %c0_23 = arith.constant 0 : index
    %41 = vector.load %arg13[%40, %c0_23] : memref<64x32xf32, #tpu.memory_space<vmem>>, vector<8x32xf32>
    tpu.vector_store %arg13[%40, %c0_23], %39 {strides = array<i32>} : memref<64x32xf32, #tpu.memory_space<vmem>>, vector<8x32xf32>,
    %c32_i32 = arith.constant 32 : i32
    %42 = tpu.assume_multiple %c32_i32, 8 : i32
    %43 = arith.index_cast %42 : i32 to index
    %c0_24 = arith.constant 0 : index
    %44 = vector.load %arg12[%43, %c0_24] : memref<64x32xf32, #tpu.memory_space<vmem>>, vector<8x32xf32>
    %cst_25 = arith.constant dense<0.000000e+00> : vector<8x32xf32>
    %45 = tpu.matmul %39, %1, %cst_25 {dimension_numbers = #tpu.dot_dimension_numbers<[1], [0], [0], [1], [0, 0, 1, 1], [], []>} : vector<8x32xf32>, vector<32x32xf32>, vector<8x32xf32> -> vector<8x32xf32>
    %46 = arith.addf %44, %45 : vector<8x32xf32>
    %47 = math.tanh %46 : vector<8x32xf32>
    %48 = arith.index_cast %42 : i32 to index
    %c0_26 = arith.constant 0 : index
    %49 = vector.load %arg13[%48, %c0_26] : memref<64x32xf32, #tpu.memory_space<vmem>>, vector<8x32xf32>
    tpu.vector_store %arg13[%48, %c0_26], %47 {strides = array<i32>} : memref<64x32xf32, #tpu.memory_space<vmem>>, vector<8x32xf32>,
    %c40_i32 = arith.constant 40 : i32
    %50 = tpu.assume_multiple %c40_i32, 8 : i32
    %51 = arith.index_cast %50 : i32 to index
    %c0_27 = arith.constant 0 : index
    %52 = vector.load %arg12[%51, %c0_27] : memref<64x32xf32, #tpu.memory_space<vmem>>, vector<8x32xf32>
    %cst_28 = arith.constant dense<0.000000e+00> : vector<8x32xf32>
    %53 = tpu.matmul %47, %1, %cst_28 {dimension_numbers = #tpu.dot_dimension_numbers<[1], [0], [0], [1], [0, 0, 1, 1], [], []>} : vector<8x32xf32>, vector<32x32xf32>, vector<8x32xf32> -> vector<8x32xf32>
    %54 = arith.addf %52, %53 : vector<8x32xf32>
    %55 = math.tanh %54 : vector<8x32xf32>
    %56 = arith.index_cast %50 : i32 to index
    %c0_29 = arith.constant 0 : index
    %57 = vector.load %arg13[%56, %c0_29] : memref<64x32xf32, #tpu.memory_space<vmem>>, vector<8x32xf32>
    tpu.vector_store %arg13[%56, %c0_29], %55 {strides = array<i32>} : memref<64x32xf32, #tpu.memory_space<vmem>>, vector<8x32xf32>,
    %c48_i32 = arith.constant 48 : i32
    %58 = tpu.assume_multiple %c48_i32, 8 : i32
    %59 = arith.index_cast %58 : i32 to index
    %c0_30 = arith.constant 0 : index
    %60 = vector.load %arg12[%59, %c0_30] : memref<64x32xf32, #tpu.memory_space<vmem>>, vector<8x32xf32>
    %cst_31 = arith.constant dense<0.000000e+00> : vector<8x32xf32>
    %61 = tpu.matmul %55, %1, %cst_31 {dimension_numbers = #tpu.dot_dimension_numbers<[1], [0], [0], [1], [0, 0, 1, 1], [], []>} : vector<8x32xf32>, vector<32x32xf32>, vector<8x32xf32> -> vector<8x32xf32>
    %62 = arith.addf %60, %61 : vector<8x32xf32>
    %63 = math.tanh %62 : vector<8x32xf32>
    %64 = arith.index_cast %58 : i32 to index
    %c0_32 = arith.constant 0 : index
    %65 = vector.load %arg13[%64, %c0_32] : memref<64x32xf32, #tpu.memory_space<vmem>>, vector<8x32xf32>
    tpu.vector_store %arg13[%64, %c0_32], %63 {strides = array<i32>} : memref<64x32xf32, #tpu.memory_space<vmem>>, vector<8x32xf32>,
    %c56_i32 = arith.constant 56 : i32
    %66 = tpu.assume_multiple %c56_i32, 8 : i32
    %67 = arith.index_cast %66 : i32 to index
    %c0_33 = arith.constant 0 : index
    %68 = vector.load %arg12[%67, %c0_33] : memref<64x32xf32, #tpu.memory_space<vmem>>, vector<8x32xf32>
    %cst_34 = arith.constant dense<0.000000e+00> : vector<8x32xf32>
    %69 = tpu.matmul %63, %1, %cst_34 {dimension_numbers = #tpu.dot_dimension_numbers<[1], [0], [0], [1], [0, 0, 1, 1], [], []>} : vector<8x32xf32>, vector<32x32xf32>, vector<8x32xf32> -> vector<8x32xf32>
    %70 = arith.addf %68, %69 : vector<8x32xf32>
    %71 = math.tanh %70 : vector<8x32xf32>
    %72 = arith.index_cast %66 : i32 to index
    %c0_35 = arith.constant 0 : index
    %73 = vector.load %arg13[%72, %c0_35] : memref<64x32xf32, #tpu.memory_space<vmem>>, vector<8x32xf32>
    tpu.vector_store %arg13[%72, %c0_35], %71 {strides = array<i32>} : memref<64x32xf32, #tpu.memory_space<vmem>>, vector<8x32xf32>,
    %c0_36 = arith.constant 0 : index
    %c0_37 = arith.constant 0 : index
    %c0_38 = arith.constant 0 : index
    %74 = vector.load %arg11[%c0_36, %c0_37, %c0_38] : memref<2x8x32xf32, #tpu.memory_space<vmem>>, vector<1x8x32xf32>
    %75 = vector.shape_cast %74 : vector<1x8x32xf32> to vector<8x32xf32>
    %76 = vector.shape_cast %71 : vector<8x32xf32> to vector<1x8x32xf32>
    tpu.vector_store %arg11[%c0_36, %c0_37, %c0_38], %76 {strides = array<i32>} : memref<2x8x32xf32, #tpu.memory_space<vmem>>, vector<1x8x32xf32>,
    %c0_39 = arith.constant 0 : index
    %c0_40 = arith.constant 0 : index
    %77 = vector.load %arg5[%c0_39, %c0_40] : memref<32x32xbf16, #tpu.memory_space<vmem>>, vector<32x32xbf16>
    %c0_41 = arith.constant 0 : index
    %c0_42 = arith.constant 0 : index
    %78 = vector.load %arg6[%c0_41, %c0_42] : memref<32x32xf32, #tpu.memory_space<vmem>>, vector<32x32xf32>
    %c0_43 = arith.constant 0 : index
    %c0_44 = arith.constant 0 : index
    %79 = vector.load %arg7[%c0_43, %c0_44] : memref<1x32xf32, #tpu.memory_space<vmem>>, vector<1x32xf32>
    %c0_45 = arith.constant 0 : index
    %c0_46 = arith.constant 0 : index
    %80 = vector.load %arg13[%c0_45, %c0_46] : memref<64x32xf32, #tpu.memory_space<vmem>>, vector<64x32xf32>
    %81 = arith.truncf %80 : vector<64x32xf32> to vector<64x32xbf16>
    %cst_47 = arith.constant dense<0.000000e+00> : vector<64x32xf32>
    %82 = tpu.matmul %81, %77, %cst_47 {dimension_numbers = #tpu.dot_dimension_numbers<[1], [0], [0], [1], [0, 0, 1, 1], [], []>} : vector<64x32xbf16>, vector<32x32xbf16>, vector<64x32xf32> -> vector<64x32xf32>
    %83 = vector.broadcast %79 : vector<1x32xf32> to vector<64x32xf32>
    %84 = arith.addf %82, %83 : vector<64x32xf32>
    %c0_48 = arith.constant 0 : index
    %c0_49 = arith.constant 0 : index
    %85 = vector.load %arg12[%c0_48, %c0_49] : memref<64x32xf32, #tpu.memory_space<vmem>>, vector<64x32xf32>
    tpu.vector_store %arg12[%c0_48, %c0_49], %84 {strides = array<i32>} : memref<64x32xf32, #tpu.memory_space<vmem>>, vector<64x32xf32>,
    %c1 = arith.constant 1 : index
    %c0_50 = arith.constant 0 : index
    %c0_51 = arith.constant 0 : index
    %86 = vector.load %arg1[%c1, %c0_50, %c0_51] : memref<2x8x32xf32, #tpu.memory_space<vmem>>, vector<1x8x32xf32>
    %87 = vector.shape_cast %86 : vector<1x8x32xf32> to vector<8x32xf32>
    %c0_i32_52 = arith.constant 0 : i32
    %88 = tpu.assume_multiple %c0_i32_52, 8 : i32
    %89 = arith.index_cast %88 : i32 to index
    %c0_53 = arith.constant 0 : index
    %90 = vector.load %arg12[%89, %c0_53] : memref<64x32xf32, #tpu.memory_space<vmem>>, vector<8x32xf32>
    %cst_54 = arith.constant dense<0.000000e+00> : vector<8x32xf32>
    %91 = tpu.matmul %87, %78, %cst_54 {dimension_numbers = #tpu.dot_dimension_numbers<[1], [0], [0], [1], [0, 0, 1, 1], [], []>} : vector<8x32xf32>, vector<32x32xf32>, vector<8x32xf32> -> vector<8x32xf32>
    %92 = arith.addf %90, %91 : vector<8x32xf32>
    %93 = math.tanh %92 : vector<8x32xf32>
    %94 = arith.index_cast %88 : i32 to index
    %c0_55 = arith.constant 0 : index
    %95 = vector.load %arg13[%94, %c0_55] : memref<64x32xf32, #tpu.memory_space<vmem>>, vector<8x32xf32>
    tpu.vector_store %arg13[%94, %c0_55], %93 {strides = array<i32>} : memref<64x32xf32, #tpu.memory_space<vmem>>, vector<8x32xf32>,
    %c8_i32_56 = arith.constant 8 : i32
    %96 = tpu.assume_multiple %c8_i32_56, 8 : i32
    %97 = arith.index_cast %96 : i32 to index
    %c0_57 = arith.constant 0 : index
    %98 = vector.load %arg12[%97, %c0_57] : memref<64x32xf32, #tpu.memory_space<vmem>>, vector<8x32xf32>
    %cst_58 = arith.constant dense<0.000000e+00> : vector<8x32xf32>
    %99 = tpu.matmul %93, %78, %cst_58 {dimension_numbers = #tpu.dot_dimension_numbers<[1], [0], [0], [1], [0, 0, 1, 1], [], []>} : vector<8x32xf32>, vector<32x32xf32>, vector<8x32xf32> -> vector<8x32xf32>
    %100 = arith.addf %98, %99 : vector<8x32xf32>
    %101 = math.tanh %100 : vector<8x32xf32>
    %102 = arith.index_cast %96 : i32 to index
    %c0_59 = arith.constant 0 : index
    %103 = vector.load %arg13[%102, %c0_59] : memref<64x32xf32, #tpu.memory_space<vmem>>, vector<8x32xf32>
    tpu.vector_store %arg13[%102, %c0_59], %101 {strides = array<i32>} : memref<64x32xf32, #tpu.memory_space<vmem>>, vector<8x32xf32>,
    %c16_i32_60 = arith.constant 16 : i32
    %104 = tpu.assume_multiple %c16_i32_60, 8 : i32
    %105 = arith.index_cast %104 : i32 to index
    %c0_61 = arith.constant 0 : index
    %106 = vector.load %arg12[%105, %c0_61] : memref<64x32xf32, #tpu.memory_space<vmem>>, vector<8x32xf32>
    %cst_62 = arith.constant dense<0.000000e+00> : vector<8x32xf32>
    %107 = tpu.matmul %101, %78, %cst_62 {dimension_numbers = #tpu.dot_dimension_numbers<[1], [0], [0], [1], [0, 0, 1, 1], [], []>} : vector<8x32xf32>, vector<32x32xf32>, vector<8x32xf32> -> vector<8x32xf32>
    %108 = arith.addf %106, %107 : vector<8x32xf32>
    %109 = math.tanh %108 : vector<8x32xf32>
    %110 = arith.index_cast %104 : i32 to index
    %c0_63 = arith.constant 0 : index
    %111 = vector.load %arg13[%110, %c0_63] : memref<64x32xf32, #tpu.memory_space<vmem>>, vector<8x32xf32>
    tpu.vector_store %arg13[%110, %c0_63], %109 {strides = array<i32>} : memref<64x32xf32, #tpu.memory_space<vmem>>, vector<8x32xf32>,
    %c24_i32_64 = arith.constant 24 : i32
    %112 = tpu.assume_multiple %c24_i32_64, 8 : i32
    %113 = arith.index_cast %112 : i32 to index
    %c0_65 = arith.constant 0 : index
    %114 = vector.load %arg12[%113, %c0_65] : memref<64x32xf32, #tpu.memory_space<vmem>>, vector<8x32xf32>
    %cst_66 = arith.constant dense<0.000000e+00> : vector<8x32xf32>
    %115 = tpu.matmul %109, %78, %cst_66 {dimension_numbers = #tpu.dot_dimension_numbers<[1], [0], [0], [1], [0, 0, 1, 1], [], []>} : vector<8x32xf32>, vector<32x32xf32>, vector<8x32xf32> -> vector<8x32xf32>
    %116 = arith.addf %114, %115 : vector<8x32xf32>
    %117 = math.tanh %116 : vector<8x32xf32>
    %118 = arith.index_cast %112 : i32 to index
    %c0_67 = arith.constant 0 : index
    %119 = vector.load %arg13[%118, %c0_67] : memref<64x32xf32, #tpu.memory_space<vmem>>, vector<8x32xf32>
    tpu.vector_store %arg13[%118, %c0_67], %117 {strides = array<i32>} : memref<64x32xf32, #tpu.memory_space<vmem>>, vector<8x32xf32>,
    %c32_i32_68 = arith.constant 32 : i32
    %120 = tpu.assume_multiple %c32_i32_68, 8 : i32
    %121 = arith.index_cast %120 : i32 to index
    %c0_69 = arith.constant 0 : index
    %122 = vector.load %arg12[%121, %c0_69] : memref<64x32xf32, #tpu.memory_space<vmem>>, vector<8x32xf32>
    %cst_70 = arith.constant dense<0.000000e+00> : vector<8x32xf32>
    %123 = tpu.matmul %117, %78, %cst_70 {dimension_numbers = #tpu.dot_dimension_numbers<[1], [0], [0], [1], [0, 0, 1, 1], [], []>} : vector<8x32xf32>, vector<32x32xf32>, vector<8x32xf32> -> vector<8x32xf32>
    %124 = arith.addf %122, %123 : vector<8x32xf32>
    %125 = math.tanh %124 : vector<8x32xf32>
    %126 = arith.index_cast %120 : i32 to index
    %c0_71 = arith.constant 0 : index
    %127 = vector.load %arg13[%126, %c0_71] : memref<64x32xf32, #tpu.memory_space<vmem>>, vector<8x32xf32>
    tpu.vector_store %arg13[%126, %c0_71], %125 {strides = array<i32>} : memref<64x32xf32, #tpu.memory_space<vmem>>, vector<8x32xf32>,
    %c40_i32_72 = arith.constant 40 : i32
    %128 = tpu.assume_multiple %c40_i32_72, 8 : i32
    %129 = arith.index_cast %128 : i32 to index
    %c0_73 = arith.constant 0 : index
    %130 = vector.load %arg12[%129, %c0_73] : memref<64x32xf32, #tpu.memory_space<vmem>>, vector<8x32xf32>
    %cst_74 = arith.constant dense<0.000000e+00> : vector<8x32xf32>
    %131 = tpu.matmul %125, %78, %cst_74 {dimension_numbers = #tpu.dot_dimension_numbers<[1], [0], [0], [1], [0, 0, 1, 1], [], []>} : vector<8x32xf32>, vector<32x32xf32>, vector<8x32xf32> -> vector<8x32xf32>
    %132 = arith.addf %130, %131 : vector<8x32xf32>
    %133 = math.tanh %132 : vector<8x32xf32>
    %134 = arith.index_cast %128 : i32 to index
    %c0_75 = arith.constant 0 : index
    %135 = vector.load %arg13[%134, %c0_75] : memref<64x32xf32, #tpu.memory_space<vmem>>, vector<8x32xf32>
    tpu.vector_store %arg13[%134, %c0_75], %133 {strides = array<i32>} : memref<64x32xf32, #tpu.memory_space<vmem>>, vector<8x32xf32>,
    %c48_i32_76 = arith.constant 48 : i32
    %136 = tpu.assume_multiple %c48_i32_76, 8 : i32
    %137 = arith.index_cast %136 : i32 to index
    %c0_77 = arith.constant 0 : index
    %138 = vector.load %arg12[%137, %c0_77] : memref<64x32xf32, #tpu.memory_space<vmem>>, vector<8x32xf32>
    %cst_78 = arith.constant dense<0.000000e+00> : vector<8x32xf32>
    %139 = tpu.matmul %133, %78, %cst_78 {dimension_numbers = #tpu.dot_dimension_numbers<[1], [0], [0], [1], [0, 0, 1, 1], [], []>} : vector<8x32xf32>, vector<32x32xf32>, vector<8x32xf32> -> vector<8x32xf32>
    %140 = arith.addf %138, %139 : vector<8x32xf32>
    %141 = math.tanh %140 : vector<8x32xf32>
    %142 = arith.index_cast %136 : i32 to index
    %c0_79 = arith.constant 0 : index
    %143 = vector.load %arg13[%142, %c0_79] : memref<64x32xf32, #tpu.memory_space<vmem>>, vector<8x32xf32>
    tpu.vector_store %arg13[%142, %c0_79], %141 {strides = array<i32>} : memref<64x32xf32, #tpu.memory_space<vmem>>, vector<8x32xf32>,
    %c56_i32_80 = arith.constant 56 : i32
    %144 = tpu.assume_multiple %c56_i32_80, 8 : i32
    %145 = arith.index_cast %144 : i32 to index
    %c0_81 = arith.constant 0 : index
    %146 = vector.load %arg12[%145, %c0_81] : memref<64x32xf32, #tpu.memory_space<vmem>>, vector<8x32xf32>
    %cst_82 = arith.constant dense<0.000000e+00> : vector<8x32xf32>
    %147 = tpu.matmul %141, %78, %cst_82 {dimension_numbers = #tpu.dot_dimension_numbers<[1], [0], [0], [1], [0, 0, 1, 1], [], []>} : vector<8x32xf32>, vector<32x32xf32>, vector<8x32xf32> -> vector<8x32xf32>
    %148 = arith.addf %146, %147 : vector<8x32xf32>
    %149 = math.tanh %148 : vector<8x32xf32>
    %150 = arith.index_cast %144 : i32 to index
    %c0_83 = arith.constant 0 : index
    %151 = vector.load %arg13[%150, %c0_83] : memref<64x32xf32, #tpu.memory_space<vmem>>, vector<8x32xf32>
    tpu.vector_store %arg13[%150, %c0_83], %149 {strides = array<i32>} : memref<64x32xf32, #tpu.memory_space<vmem>>, vector<8x32xf32>,
    %c1_84 = arith.constant 1 : index
    %c0_85 = arith.constant 0 : index
    %c0_86 = arith.constant 0 : index
    %152 = vector.load %arg11[%c1_84, %c0_85, %c0_86] : memref<2x8x32xf32, #tpu.memory_space<vmem>>, vector<1x8x32xf32>
    %153 = vector.shape_cast %152 : vector<1x8x32xf32> to vector<8x32xf32>
    %154 = vector.shape_cast %149 : vector<8x32xf32> to vector<1x8x32xf32>
    tpu.vector_store %arg11[%c1_84, %c0_85, %c0_86], %154 {strides = array<i32>} : memref<2x8x32xf32, #tpu.memory_space<vmem>>, vector<1x8x32xf32>,
    %c0_87 = arith.constant 0 : index
    %c0_88 = arith.constant 0 : index
    %155 = vector.load %arg13[%c0_87, %c0_88] : memref<64x32xf32, #tpu.memory_space<vmem>>, vector<64x32xf32>
    %156 = arith.truncf %155 : vector<64x32xf32> to vector<64x32xbf16>
    %c0_89 = arith.constant 0 : index
    %c0_90 = arith.constant 0 : index
    %157 = vector.load %arg8[%c0_89, %c0_90] : memref<32x128xbf16, #tpu.memory_space<vmem>>, vector<32x128xbf16>
    %cst_91 = arith.constant dense<0.000000e+00> : vector<64x128xf32>
    %158 = tpu.matmul %156, %157, %cst_91 {dimension_numbers = #tpu.dot_dimension_numbers<[1], [0], [0], [1], [0, 0, 1, 1], [], []>} : vector<64x32xbf16>, vector<32x128xbf16>, vector<64x128xf32> -> vector<64x128xf32>
    %c0_92 = arith.constant 0 : index
    %c0_93 = arith.constant 0 : index
    %159 = vector.load %arg9[%c0_92, %c0_93] : memref<1x128xf32, #tpu.memory_space<vmem>>, vector<1x128xf32>
    %160 = vector.broadcast %159 : vector<1x128xf32> to vector<64x128xf32>
    %161 = arith.addf %158, %160 : vector<64x128xf32>
    %c0_94 = arith.constant 0 : index
    %c0_95 = arith.constant 0 : index
    %162 = vector.load %arg10[%c0_94, %c0_95] : memref<64x128xf32, #tpu.memory_space<vmem>>, vector<64x128xf32>
    tpu.vector_store %arg10[%c0_94, %c0_95], %161 {strides = array<i32>} : memref<64x128xf32, #tpu.memory_space<vmem>>, vector<64x128xf32>,
    return
  }
}

</mosaic_0001>

<llo_original>
// kernel: _fused_forward.1
$region0: #{_fused_forward.1}
  #allocation0 [shape = 'u32[]', space=smem, size = 0x4, offset = 0x4, fixed_abs, tag = 'smem constant byte address 0x4 - core index']
  #allocation1 [shape = 'u32[72,128]{1,0:T(1,128)}', space=vmem, size = 0x9000, scoped, tag = 'internal scratch']
  #allocation2 [shape = 'f32[64,32]{1,0:T(8,128)}', space=vmem, size = 0x8000, scoped, tag = 'scratch operand']
  #allocation3 [shape = 'f32[64,32]{1,0:T(8,128)}', space=vmem, size = 0x8000, scoped, tag = 'scratch operand']
  %s0 = inlined_call_operand.vmem [shape: bf16[64,16], index: 0, kind: input, shape index: {}]
  %s1 = inlined_call_operand.vmem [shape: f32[2,8,32], index: 1, kind: input, shape index: {}]
  %s2 = inlined_call_operand.vmem [shape: bf16[16,32], index: 2, kind: input, shape index: {}]
  %s3 = inlined_call_operand.vmem [shape: f32[32,32], index: 3, kind: input, shape index: {}]
  %s4 = inlined_call_operand.vmem [shape: f32[1,32], index: 4, kind: input, shape index: {}]
  %s5 = inlined_call_operand.vmem [shape: bf16[32,32], index: 5, kind: input, shape index: {}]
  %s6 = inlined_call_operand.vmem [shape: f32[32,32], index: 6, kind: input, shape index: {}]
  %s7 = inlined_call_operand.vmem [shape: f32[1,32], index: 7, kind: input, shape index: {}]
  %s8 = inlined_call_operand.vmem [shape: bf16[32,128], index: 8, kind: input, shape index: {}]
  %s9 = inlined_call_operand.vmem [shape: f32[1,128], index: 9, kind: input, shape index: {}]
  %s10 = inlined_call_operand.vmem [shape: f32[64,128], index: 10, kind: output, shape index: {0}]
  %s11 = inlined_call_operand.vmem [shape: f32[2,8,32], index: 11, kind: output, shape index: {1}]
  %12 = xla_tuple %s10, %s11
  %s13 = sld [smem:[#allocation0]]
  $region58: #{_fused_forward.1} parent=0
    _
  %s15 = ssub.s32 1, %s13
  %s16 = scalar_select 0, %s15, %s13
  // Predicated region
  $region2: #{_fused_forward.1} parent=0 // pred_check
    _
  $region3: #{_fused_forward.1} parent=0 // pred_check_branch
    %18 = sbr.rel (0) target = $region5
  $region4: #{_fused_forward.1} parent=0 // pred_region
    _
  $region5: #{_fused_forward.1} parent=0 // pred_fallthru
    _
  // Predicated region
  $region6: #{_fused_forward.1} parent=0 // pred_check
    _
  $region7: #{_fused_forward.1} parent=0 // pred_check_branch
    %20 = sbr.rel (0) target = $region9
  $region8: #{_fused_forward.1} parent=0 // pred_region
    _
  $region9: #{_fused_forward.1} parent=0 // pred_fallthru
    _
  // Predicated region
  $region10: #{_fused_forward.1} parent=0 // pred_check
    _
  $region11: #{_fused_forward.1} parent=0 // pred_check_branch
    %22 = sbr.rel (0) target = $region13
  $region12: #{_fused_forward.1} parent=0 // pred_region
    _
  $region13: #{_fused_forward.1} parent=0 // pred_fallthru
    _
  // Predicated region
  $region14: #{_fused_forward.1} parent=0 // pred_check
    _
  $region15: #{_fused_forward.1} parent=0 // pred_check_branch
    %24 = sbr.rel (0) target = $region17
  $region16: #{_fused_forward.1} parent=0 // pred_region
    _
  $region17: #{_fused_forward.1} parent=0 // pred_fallthru
    _
  // Predicated region
  $region18: #{_fused_forward.1} parent=0 // pred_check
    _
  $region19: #{_fused_forward.1} parent=0 // pred_check_branch
    %26 = sbr.rel (0) target = $region21
  $region20: #{_fused_forward.1} parent=0 // pred_region
    _
  $region21: #{_fused_forward.1} parent=0 // pred_fallthru
    _
  // Predicated region
  $region22: #{_fused_forward.1} parent=0 // pred_check
    _
  $region23: #{_fused_forward.1} parent=0 // pred_check_branch
    %28 = sbr.rel (0) target = $region25
  $region24: #{_fused_forward.1} parent=0 // pred_region
    _
  $region25: #{_fused_forward.1} parent=0 // pred_fallthru
    _
  // Predicated region
  $region26: #{_fused_forward.1} parent=0 // pred_check
    _
  $region27: #{_fused_forward.1} parent=0 // pred_check_branch
    %30 = sbr.rel (0) target = $region29
  $region28: #{_fused_forward.1} parent=0 // pred_region
    _
  $region29: #{_fused_forward.1} parent=0 // pred_fallthru
    _
  // Predicated region
  $region30: #{_fused_forward.1} parent=0 // pred_check
    _
  $region31: #{_fused_forward.1} parent=0 // pred_check_branch
    %32 = sbr.rel (0) target = $region33
  $region32: #{_fused_forward.1} parent=0 // pred_region
    _
  $region33: #{_fused_forward.1} parent=0 // pred_fallthru
    _
  // Predicated region
  $region34: #{_fused_forward.1} parent=0 // pred_check
    _
  $region35: #{_fused_forward.1} parent=0 // pred_check_branch
    %34 = sbr.rel (0) target = $region37
  $region36: #{_fused_forward.1} parent=0 // pred_region
    _
  $region37: #{_fused_forward.1} parent=0 // pred_fallthru
    _
  // Predicated region
  $region38: #{_fused_forward.1} parent=0 // pred_check
    _
  $region39: #{_fused_forward.1} parent=0 // pred_check_branch
    %36 = sbr.rel (0) target = $region41
  $region40: #{_fused_forward.1} parent=0 // pred_region
    _
  $region41: #{_fused_forward.1} parent=0 // pred_fallthru
    _
  %v38 = vld [vmem:[%s2] sm:$0xf]
  %v39 = vld [vmem:[%s2 + $0x4] sm:$0xf]
  %v40 = vld [vmem:[%s3] sm:$0xff]
  %v41 = vld [vmem:[%s3 + $0x8] sm:$0xff]
  %v42 = vld [vmem:[%s3 + $0x10] sm:$0xff]
  %v43 = vld [vmem:[%s3 + $0x18] sm:$0xff]
  %v44 = vld [vmem:[%s4] sm:$0x1]
  %v45 = vld [vmem:[%s0] sm:$0xf]
  %v46 = vld [vmem:[%s0 + $0x4] sm:$0xf]
  %v47 = vld [vmem:[%s0 + $0x8] sm:$0xf]
  %v48 = vld [vmem:[%s0 + $0xc] sm:$0xf]
  %v49 = vld [vmem:[%s0 + $0x10] sm:$0xf]
  %v50 = vld [vmem:[%s0 + $0x14] sm:$0xf]
  %v51 = vld [vmem:[%s0 + $0x18] sm:$0xf]
  %v52 = vld [vmem:[%s0 + $0x1c] sm:$0xf]
  %v54 = vperm.slane %v44, 0
  %v64 = vunpack.c.l.b16 %v45
  %v65 = vunpack.c.l.b16 %v46
  %v66 = vunpack.c.l.b16 %v47
  %v67 = vunpack.c.l.b16 %v48
  %v68 = vunpack.c.l.b16 %v49
  %v69 = vunpack.c.l.b16 %v50
  %v70 = vunpack.c.l.b16 %v51
  %v71 = vunpack.c.l.b16 %v52
  %v72 = vpack.c.b16 %v65, %v64
  %v73 = vpack.c.b16 %v67, %v66
  %v74 = vpack.c.b16 %v69, %v68
  %v75 = vpack.c.b16 %v71, %v70
  %v78 = vunpack.c.l.b16 %v38
  %v79 = vunpack.c.l.b16 %v39
  %v80 = vpack.c.b16 %v79, %v78
  %vm82 = vcmask 130048
  %v84 = vsel %vm82, %v72, 0
  %v87 = vsel %vm82, %v73, 0
  %v90 = vsel %vm82, %v74, 0
  %v93 = vsel %vm82, %v75, 0
  %95 = vmatpush.bf16.msra.mxu0 0
  %96 = vmatpush.bf16.msra.mxu0 0
  %97 = vmatpush.bf16.msra.mxu0 0
  %98 = vmatpush.bf16.msra.mxu0 0
  %99 = vmatpush.bf16.msra.mxu0 0
  %100 = vmatpush.bf16.msra.mxu0 0
  %101 = vmatpush.bf16.msra.mxu0 0
  %102 = vmatpush.bf16.msra.mxu0 %v80
  %103 = vmatmul.bf16.gmra.mxu0 %v84
  %v104 = vpop.f32.mrf.mxu0
  %v105 = vadd.f32 %v54, %v104
  %v106 = vpop.f32.mrf.mxu0
  %v107 = vadd.f32 %v54, %v106
  %108 = vmatmul.bf16.gmra.mxu0 %v87
  %v109 = vpop.f32.mrf.mxu0
  %v110 = vadd.f32 %v54, %v109
  %v111 = vpop.f32.mrf.mxu0
  %v112 = vadd.f32 %v54, %v111
  %113 = vmatmul.bf16.gmra.mxu0 %v90
  %v114 = vpop.f32.mrf.mxu0
  %v115 = vadd.f32 %v54, %v114
  %v116 = vpop.f32.mrf.mxu0
  %v117 = vadd.f32 %v54, %v116
  %118 = vmatmul.bf16.gmra.mxu0 %v93
  %v119 = vpop.f32.mrf.mxu0
  %v120 = vadd.f32 %v54, %v119
  %v121 = vpop.f32.mrf.mxu0
  %v122 = vadd.f32 %v54, %v121
  %123 = vdwg.mxu0
  %vm124 = vcmask 261120
  %125 = vst.msk [vmem:[#allocation2] sm:$0xff] %vm124, %v105
  %126 = vst.msk [vmem:[#allocation2 + $0x8] sm:$0xff] %vm124, %v107
  %127 = vst.msk [vmem:[#allocation2 + $0x10] sm:$0xff] %vm124, %v110
  %128 = vst.msk [vmem:[#allocation2 + $0x18] sm:$0xff] %vm124, %v112
  %129 = vst.msk [vmem:[#allocation2 + $0x20] sm:$0xff] %vm124, %v115
  %130 = vst.msk [vmem:[#allocation2 + $0x28] sm:$0xff] %vm124, %v117
  %131 = vst.msk [vmem:[#allocation2 + $0x30] sm:$0xff] %vm124, %v120
  %132 = vst.msk [vmem:[#allocation2 + $0x38] sm:$0xff] %vm124, %v122
  %v133 = vld [vmem:[%s1] sm:$0xff]
  %v134 = vld [vmem:[#allocation2] sm:$0xff]
  %v136 = vsel %vm124, %v133, 0
  %138 = vmatpush.msra.mxu0 0.0
  %139 = vmatpush.msra.mxu0 0.0
  %140 = vmatpush.msra.mxu0 0.0
  %141 = vmatpush.msra.mxu0 0.0
  %142 = vmatpush.msra.mxu0 0.0
  %143 = vmatpush.msra.mxu0 0.0
  %144 = vmatpush.msra.mxu0 0.0
  %145 = vmatpush.msra.mxu0 0.0
  %146 = vmatpush.msra.mxu0 0.0
  %147 = vmatpush.msra.mxu0 0.0
  %148 = vmatpush.msra.mxu0 0.0
  %149 = vmatpush.msra.mxu0 0.0
  %150 = vmatpush.msra.mxu0 %v43
  %151 = vmatpush.msra.mxu0 %v42
  %152 = vmatpush.msra.mxu0 %v41
  %153 = vmatpush.msra.mxu0 %v40
  %154 = vmatmul.f32.gmra.mxu0 %v136
  %v155 = vpop.f32.mrf.mxu0
  %v156 = vadd.f32 0.0, %v155
  %157 = vdwg.mxu0
  %v158 = vadd.f32 %v134, %v156
  %v159 = vtanh.pop %v158
  %160 = vst.msk [vmem:[#allocation3] sm:$0xff] %vm124, %v159
  %s161 = scalar_lea.vmem [#allocation2], 8
  %v162 = vld [vmem:[%s161] sm:$0xff]
  %v164 = vsel %vm124, %v159, 0
  %166 = vmatpush.msra.mxu0 0.0
  %167 = vmatpush.msra.mxu0 0.0
  %168 = vmatpush.msra.mxu0 0.0
  %169 = vmatpush.msra.mxu0 0.0
  %170 = vmatpush.msra.mxu0 0.0
  %171 = vmatpush.msra.mxu0 0.0
  %172 = vmatpush.msra.mxu0 0.0
  %173 = vmatpush.msra.mxu0 0.0
  %174 = vmatpush.msra.mxu0 0.0
  %175 = vmatpush.msra.mxu0 0.0
  %176 = vmatpush.msra.mxu0 0.0
  %177 = vmatpush.msra.mxu0 0.0
  %178 = vmatpush.msra.mxu0 %v43
  %179 = vmatpush.msra.mxu0 %v42
  %180 = vmatpush.msra.mxu0 %v41
  %181 = vmatpush.msra.mxu0 %v40
  %182 = vmatmul.f32.gmra.mxu0 %v164
  %v183 = vpop.f32.mrf.mxu0
  %v184 = vadd.f32 0.0, %v183
  %185 = vdwg.mxu0
  %v186 = vadd.f32 %v162, %v184
  %v187 = vtanh.pop %v186
  %s188 = scalar_lea.vmem [#allocation3], 8
  %189 = vst.msk [vmem:[%s188] sm:$0xff] %vm124, %v187
  %s190 = scalar_lea.vmem [#allocation2], 16
  %v191 = vld [vmem:[%s190] sm:$0xff]
  %v193 = vsel %vm124, %v187, 0
  %195 = vmatpush.msra.mxu0 0.0
  %196 = vmatpush.msra.mxu0 0.0
  %197 = vmatpush.msra.mxu0 0.0
  %198 = vmatpush.msra.mxu0 0.0
  %199 = vmatpush.msra.mxu0 0.0
  %200 = vmatpush.msra.mxu0 0.0
  %201 = vmatpush.msra.mxu0 0.0
  %202 = vmatpush.msra.mxu0 0.0
  %203 = vmatpush.msra.mxu0 0.0
  %204 = vmatpush.msra.mxu0 0.0
  %205 = vmatpush.msra.mxu0 0.0
  %206 = vmatpush.msra.mxu0 0.0
  %207 = vmatpush.msra.mxu0 %v43
  %208 = vmatpush.msra.mxu0 %v42
  %209 = vmatpush.msra.mxu0 %v41
  %210 = vmatpush.msra.mxu0 %v40
  %211 = vmatmul.f32.gmra.mxu0 %v193
  %v212 = vpop.f32.mrf.mxu0
  %v213 = vadd.f32 0.0, %v212
  %214 = vdwg.mxu0
  %v215 = vadd.f32 %v191, %v213
  %v216 = vtanh.pop %v215
  %s217 = scalar_lea.vmem [#allocation3], 16
  %218 = vst.msk [vmem:[%s217] sm:$0xff] %vm124, %v216
  %s219 = scalar_lea.vmem [#allocation2], 24
  %v220 = vld [vmem:[%s219] sm:$0xff]
  %v222 = vsel %vm124, %v216, 0
  %224 = vmatpush.msra.mxu0 0.0
  %225 = vmatpush.msra.mxu0 0.0
  %226 = vmatpush.msra.mxu0 0.0
  %227 = vmatpush.msra.mxu0 0.0
  %228 = vmatpush.msra.mxu0 0.0
  %229 = vmatpush.msra.mxu0 0.0
  %230 = vmatpush.msra.mxu0 0.0
  %231 = vmatpush.msra.mxu0 0.0
  %232 = vmatpush.msra.mxu0 0.0
  %233 = vmatpush.msra.mxu0 0.0
  %234 = vmatpush.msra.mxu0 0.0
  %235 = vmatpush.msra.mxu0 0.0
  %236 = vmatpush.msra.mxu0 %v43
  %237 = vmatpush.msra.mxu0 %v42
  %238 = vmatpush.msra.mxu0 %v41
  %239 = vmatpush.msra.mxu0 %v40
  %240 = vmatmul.f32.gmra.mxu0 %v222
  %v241 = vpop.f32.mrf.mxu0
  %v242 = vadd.f32 0.0, %v241
  %243 = vdwg.mxu0
  %v244 = vadd.f32 %v220, %v242
  %v245 = vtanh.pop %v244
  %s246 = scalar_lea.vmem [#allocation3], 24
  %247 = vst.msk [vmem:[%s246] sm:$0xff] %vm124, %v245
  %s248 = scalar_lea.vmem [#allocation2], 32
  %v249 = vld [vmem:[%s248] sm:$0xff]
  %v251 = vsel %vm124, %v245, 0
  %253 = vmatpush.msra.mxu0 0.0
  %254 = vmatpush.msra.mxu0 0.0
  %255 = vmatpush.msra.mxu0 0.0
  %256 = vmatpush.msra.mxu0 0.0
  %257 = vmatpush.msra.mxu0 0.0
  %258 = vmatpush.msra.mxu0 0.0
  %259 = vmatpush.msra.mxu0 0.0
  %260 = vmatpush.msra.mxu0 0.0
  %261 = vmatpush.msra.mxu0 0.0
  %262 = vmatpush.msra.mxu0 0.0
  %263 = vmatpush.msra.mxu0 0.0
  %264 = vmatpush.msra.mxu0 0.0
  %265 = vmatpush.msra.mxu0 %v43
  %266 = vmatpush.msra.mxu0 %v42
  %267 = vmatpush.msra.mxu0 %v41
  %268 = vmatpush.msra.mxu0 %v40
  %269 = vmatmul.f32.gmra.mxu0 %v251
  %v270 = vpop.f32.mrf.mxu0
  %v271 = vadd.f32 0.0, %v270
  %272 = vdwg.mxu0
  %v273 = vadd.f32 %v249, %v271
  %v274 = vtanh.pop %v273
  %s275 = scalar_lea.vmem [#allocation3], 32
  %276 = vst.msk [vmem:[%s275] sm:$0xff] %vm124, %v274
  %s277 = scalar_lea.vmem [#allocation2], 40
  %v278 = vld [vmem:[%s277] sm:$0xff]
  %v280 = vsel %vm124, %v274, 0
  %282 = vmatpush.msra.mxu0 0.0
  %283 = vmatpush.msra.mxu0 0.0
  %284 = vmatpush.msra.mxu0 0.0
  %285 = vmatpush.msra.mxu0 0.0
  %286 = vmatpush.msra.mxu0 0.0
  %287 = vmatpush.msra.mxu0 0.0
  %288 = vmatpush.msra.mxu0 0.0
  %289 = vmatpush.msra.mxu0 0.0
  %290 = vmatpush.msra.mxu0 0.0
  %291 = vmatpush.msra.mxu0 0.0
  %292 = vmatpush.msra.mxu0 0.0
  %293 = vmatpush.msra.mxu0 0.0
  %294 = vmatpush.msra.mxu0 %v43
  %295 = vmatpush.msra.mxu0 %v42
  %296 = vmatpush.msra.mxu0 %v41
  %297 = vmatpush.msra.mxu0 %v40
  %298 = vmatmul.f32.gmra.mxu0 %v280
  %v299 = vpop.f32.mrf.mxu0
  %v300 = vadd.f32 0.0, %v299
  %301 = vdwg.mxu0
  %v302 = vadd.f32 %v278, %v300
  %v303 = vtanh.pop %v302
  %s304 = scalar_lea.vmem [#allocation3], 40
  %305 = vst.msk [vmem:[%s304] sm:$0xff] %vm124, %v303
  %s306 = scalar_lea.vmem [#allocation2], 48
  %v307 = vld [vmem:[%s306] sm:$0xff]
  %v309 = vsel %vm124, %v303, 0
  %311 = vmatpush.msra.mxu0 0.0
  %312 = vmatpush.msra.mxu0 0.0
  %313 = vmatpush.msra.mxu0 0.0
  %314 = vmatpush.msra.mxu0 0.0
  %315 = vmatpush.msra.mxu0 0.0
  %316 = vmatpush.msra.mxu0 0.0
  %317 = vmatpush.msra.mxu0 0.0
  %318 = vmatpush.msra.mxu0 0.0
  %319 = vmatpush.msra.mxu0 0.0
  %320 = vmatpush.msra.mxu0 0.0
  %321 = vmatpush.msra.mxu0 0.0
  %322 = vmatpush.msra.mxu0 0.0
  %323 = vmatpush.msra.mxu0 %v43
  %324 = vmatpush.msra.mxu0 %v42
  %325 = vmatpush.msra.mxu0 %v41
  %326 = vmatpush.msra.mxu0 %v40
  %327 = vmatmul.f32.gmra.mxu0 %v309
  %v328 = vpop.f32.mrf.mxu0
  %v329 = vadd.f32 0.0, %v328
  %330 = vdwg.mxu0
  %v331 = vadd.f32 %v307, %v329
  %v332 = vtanh.pop %v331
  %s333 = scalar_lea.vmem [#allocation3], 48
  %334 = vst.msk [vmem:[%s333] sm:$0xff] %vm124, %v332
  %s335 = scalar_lea.vmem [#allocation2], 56
  %v336 = vld [vmem:[%s335] sm:$0xff]
  %v338 = vsel %vm124, %v332, 0
  %340 = vmatpush.msra.mxu0 0.0
  %341 = vmatpush.msra.mxu0 0.0
  %342 = vmatpush.msra.mxu0 0.0
  %343 = vmatpush.msra.mxu0 0.0
  %344 = vmatpush.msra.mxu0 0.0
  %345 = vmatpush.msra.mxu0 0.0
  %346 = vmatpush.msra.mxu0 0.0
  %347 = vmatpush.msra.mxu0 0.0
  %348 = vmatpush.msra.mxu0 0.0
  %349 = vmatpush.msra.mxu0 0.0
  %350 = vmatpush.msra.mxu0 0.0
  %351 = vmatpush.msra.mxu0 0.0
  %352 = vmatpush.msra.mxu0 %v43
  %353 = vmatpush.msra.mxu0 %v42
  %354 = vmatpush.msra.mxu0 %v41
  %355 = vmatpush.msra.mxu0 %v40
  %356 = vmatmul.f32.gmra.mxu0 %v338
  %v357 = vpop.f32.mrf.mxu0
  %v358 = vadd.f32 0.0, %v357
  %359 = vdwg.mxu0
  %v360 = vadd.f32 %v336, %v358
  %v361 = vtanh.pop %v360
  %s362 = scalar_lea.vmem [#allocation3], 56
  %363 = vst.msk [vmem:[%s362] sm:$0xff] %vm124, %v361
  %364 = vst.msk [vmem:[%s11] sm:$0xff] %vm124, %v361
  %v365 = vld [vmem:[%s5] sm:$0xf]
  %v366 = vld [vmem:[%s5 + $0x4] sm:$0xf]
  %v367 = vld [vmem:[%s5 + $0x8] sm:$0xf]
  %v368 = vld [vmem:[%s5 + $0xc] sm:$0xf]
  %v369 = vld [vmem:[%s6] sm:$0xff]
  %v370 = vld [vmem:[%s6 + $0x8] sm:$0xff]
  %v371 = vld [vmem:[%s6 + $0x10] sm:$0xff]
  %v372 = vld [vmem:[%s6 + $0x18] sm:$0xff]
  %v373 = vld [vmem:[%s7] sm:$0x1]
  %v374 = vld [vmem:[#allocation3] sm:$0xff]
  %v375 = vld [vmem:[#allocation3 + $0x8] sm:$0xff]
  %v376 = vld [vmem:[#allocation3 + $0x10] sm:$0xff]
  %v377 = vld [vmem:[#allocation3 + $0x18] sm:$0xff]
  %v378 = vld [vmem:[#allocation3 + $0x20] sm:$0xff]
  %v379 = vld [vmem:[#allocation3 + $0x28] sm:$0xff]
  %v380 = vld [vmem:[#allocation3 + $0x30] sm:$0xff]
  %v381 = vld [vmem:[#allocation3 + $0x38] sm:$0xff]
  %v382 = vpack.c.bf16 %v375, %v374
  %v383 = vpack.c.bf16 %v377, %v376
  %v384 = vpack.c.bf16 %v379, %v378
  %v385 = vpack.c.bf16 %v381, %v380
  %v387 = vperm.slane %v373, 0
  %v393 = vunpack.c.l.b16 %v365
  %v394 = vunpack.c.l.b16 %v366
  %v395 = vunpack.c.l.b16 %v367
  %v396 = vunpack.c.l.b16 %v368
  %v397 = vpack.c.b16 %v394, %v393
  %v398 = vpack.c.b16 %v396, %v395
  %v402 = vsel %vm124, %v382, 0
  %v405 = vsel %vm124, %v383, 0
  %v408 = vsel %vm124, %v384, 0
  %v411 = vsel %vm124, %v385, 0
  %413 = vmatpush.bf16.msra.mxu0 0
  %414 = vmatpush.bf16.msra.mxu0 0
  %415 = vmatpush.bf16.msra.mxu0 0
  %416 = vmatpush.bf16.msra.mxu0 0
  %417 = vmatpush.bf16.msra.mxu0 0
  %418 = vmatpush.bf16.msra.mxu0 0
  %419 = vmatpush.bf16.msra.mxu0 %v398
  %420 = vmatpush.bf16.msra.mxu0 %v397
  %421 = vmatmul.bf16.gmra.mxu0 %v402
  %v422 = vpop.f32.mrf.mxu0
  %v423 = vadd.f32 %v387, %v422
  %v424 = vpop.f32.mrf.mxu0
  %v425 = vadd.f32 %v387, %v424
  %426 = vmatmul.bf16.gmra.mxu0 %v405
  %v427 = vpop.f32.mrf.mxu0
  %v428 = vadd.f32 %v387, %v427
  %v429 = vpop.f32.mrf.mxu0
  %v430 = vadd.f32 %v387, %v429
  %431 = vmatmul.bf16.gmra.mxu0 %v408
  %v432 = vpop.f32.mrf.mxu0
  %v433 = vadd.f32 %v387, %v432
  %v434 = vpop.f32.mrf.mxu0
  %v435 = vadd.f32 %v387, %v434
  %436 = vmatmul.bf16.gmra.mxu0 %v411
  %v437 = vpop.f32.mrf.mxu0
  %v438 = vadd.f32 %v387, %v437
  %v439 = vpop.f32.mrf.mxu0
  %v440 = vadd.f32 %v387, %v439
  %441 = vdwg.mxu0
  %442 = vst.msk [vmem:[#allocation2] sm:$0xff] %vm124, %v423
  %443 = vst.msk [vmem:[#allocation2 + $0x8] sm:$0xff] %vm124, %v425
  %444 = vst.msk [vmem:[#allocation2 + $0x10] sm:$0xff] %vm124, %v428
  %445 = vst.msk [vmem:[#allocation2 + $0x18] sm:$0xff] %vm124, %v430
  %446 = vst.msk [vmem:[#allocation2 + $0x20] sm:$0xff] %vm124, %v433
  %447 = vst.msk [vmem:[#allocation2 + $0x28] sm:$0xff] %vm124, %v435
  %448 = vst.msk [vmem:[#allocation2 + $0x30] sm:$0xff] %vm124, %v438
  %449 = vst.msk [vmem:[#allocation2 + $0x38] sm:$0xff] %vm124, %v440
  %s450 = scalar_lea.vmem %s1, 8
  %v451 = vld [vmem:[%s450] sm:$0xff]
  %v452 = vld [vmem:[#allocation2] sm:$0xff]
  %v454 = vsel %vm124, %v451, 0
  %456 = vmatpush.msra.mxu0 0.0
  %457 = vmatpush.msra.mxu0 0.0
  %458 = vmatpush.msra.mxu0 0.0
  %459 = vmatpush.msra.mxu0 0.0
  %460 = vmatpush.msra.mxu0 0.0
  %461 = vmatpush.msra.mxu0 0.0
  %462 = vmatpush.msra.mxu0 0.0
  %463 = vmatpush.msra.mxu0 0.0
  %464 = vmatpush.msra.mxu0 0.0
  %465 = vmatpush.msra.mxu0 0.0
  %466 = vmatpush.msra.mxu0 0.0
  %467 = vmatpush.msra.mxu0 0.0
  %468 = vmatpush.msra.mxu0 %v372
  %469 = vmatpush.msra.mxu0 %v371
  %470 = vmatpush.msra.mxu0 %v370
  %471 = vmatpush.msra.mxu0 %v369
  %472 = vmatmul.f32.gmra.mxu0 %v454
  %v473 = vpop.f32.mrf.mxu0
  %v474 = vadd.f32 0.0, %v473
  %475 = vdwg.mxu0
  %v476 = vadd.f32 %v452, %v474
  %v477 = vtanh.pop %v476
  %478 = vst.msk [vmem:[#allocation3] sm:$0xff] %vm124, %v477
  %v479 = vld [vmem:[%s161] sm:$0xff]
  %v481 = vsel %vm124, %v477, 0
  %483 = vmatpush.msra.mxu0 0.0
  %484 = vmatpush.msra.mxu0 0.0
  %485 = vmatpush.msra.mxu0 0.0
  %486 = vmatpush.msra.mxu0 0.0
  %487 = vmatpush.msra.mxu0 0.0
  %488 = vmatpush.msra.mxu0 0.0
  %489 = vmatpush.msra.mxu0 0.0
  %490 = vmatpush.msra.mxu0 0.0
  %491 = vmatpush.msra.mxu0 0.0
  %492 = vmatpush.msra.mxu0 0.0
  %493 = vmatpush.msra.mxu0 0.0
  %494 = vmatpush.msra.mxu0 0.0
  %495 = vmatpush.msra.mxu0 %v372
  %496 = vmatpush.msra.mxu0 %v371
  %497 = vmatpush.msra.mxu0 %v370
  %498 = vmatpush.msra.mxu0 %v369
  %499 = vmatmul.f32.gmra.mxu0 %v481
  %v500 = vpop.f32.mrf.mxu0
  %v501 = vadd.f32 0.0, %v500
  %502 = vdwg.mxu0
  %v503 = vadd.f32 %v479, %v501
  %v504 = vtanh.pop %v503
  %505 = vst.msk [vmem:[%s188] sm:$0xff] %vm124, %v504
  %v506 = vld [vmem:[%s190] sm:$0xff]
  %v508 = vsel %vm124, %v504, 0
  %510 = vmatpush.msra.mxu0 0.0
  %511 = vmatpush.msra.mxu0 0.0
  %512 = vmatpush.msra.mxu0 0.0
  %513 = vmatpush.msra.mxu0 0.0
  %514 = vmatpush.msra.mxu0 0.0
  %515 = vmatpush.msra.mxu0 0.0
  %516 = vmatpush.msra.mxu0 0.0
  %517 = vmatpush.msra.mxu0 0.0
  %518 = vmatpush.msra.mxu0 0.0
  %519 = vmatpush.msra.mxu0 0.0
  %520 = vmatpush.msra.mxu0 0.0
  %521 = vmatpush.msra.mxu0 0.0
  %522 = vmatpush.msra.mxu0 %v372
  %523 = vmatpush.msra.mxu0 %v371
  %524 = vmatpush.msra.mxu0 %v370
  %525 = vmatpush.msra.mxu0 %v369
  %526 = vmatmul.f32.gmra.mxu0 %v508
  %v527 = vpop.f32.mrf.mxu0
  %v528 = vadd.f32 0.0, %v527
  %529 = vdwg.mxu0
  %v530 = vadd.f32 %v506, %v528
  %v531 = vtanh.pop %v530
  %532 = vst.msk [vmem:[%s217] sm:$0xff] %vm124, %v531
  %v533 = vld [vmem:[%s219] sm:$0xff]
  %v535 = vsel %vm124, %v531, 0
  %537 = vmatpush.msra.mxu0 0.0
  %538 = vmatpush.msra.mxu0 0.0
  %539 = vmatpush.msra.mxu0 0.0
  %540 = vmatpush.msra.mxu0 0.0
  %541 = vmatpush.msra.mxu0 0.0
  %542 = vmatpush.msra.mxu0 0.0
  %543 = vmatpush.msra.mxu0 0.0
  %544 = vmatpush.msra.mxu0 0.0
  %545 = vmatpush.msra.mxu0 0.0
  %546 = vmatpush.msra.mxu0 0.0
  %547 = vmatpush.msra.mxu0 0.0
  %548 = vmatpush.msra.mxu0 0.0
  %549 = vmatpush.msra.mxu0 %v372
  %550 = vmatpush.msra.mxu0 %v371
  %551 = vmatpush.msra.mxu0 %v370
  %552 = vmatpush.msra.mxu0 %v369
  %553 = vmatmul.f32.gmra.mxu0 %v535
  %v554 = vpop.f32.mrf.mxu0
  %v555 = vadd.f32 0.0, %v554
  %556 = vdwg.mxu0
  %v557 = vadd.f32 %v533, %v555
  %v558 = vtanh.pop %v557
  %559 = vst.msk [vmem:[%s246] sm:$0xff] %vm124, %v558
  %v560 = vld [vmem:[%s248] sm:$0xff]
  %v562 = vsel %vm124, %v558, 0
  %564 = vmatpush.msra.mxu0 0.0
  %565 = vmatpush.msra.mxu0 0.0
  %566 = vmatpush.msra.mxu0 0.0
  %567 = vmatpush.msra.mxu0 0.0
  %568 = vmatpush.msra.mxu0 0.0
  %569 = vmatpush.msra.mxu0 0.0
  %570 = vmatpush.msra.mxu0 0.0
  %571 = vmatpush.msra.mxu0 0.0
  %572 = vmatpush.msra.mxu0 0.0
  %573 = vmatpush.msra.mxu0 0.0
  %574 = vmatpush.msra.mxu0 0.0
  %575 = vmatpush.msra.mxu0 0.0
  %576 = vmatpush.msra.mxu0 %v372
  %577 = vmatpush.msra.mxu0 %v371
  %578 = vmatpush.msra.mxu0 %v370
  %579 = vmatpush.msra.mxu0 %v369
  %580 = vmatmul.f32.gmra.mxu0 %v562
  %v581 = vpop.f32.mrf.mxu0
  %v582 = vadd.f32 0.0, %v581
  %583 = vdwg.mxu0
  %v584 = vadd.f32 %v560, %v582
  %v585 = vtanh.pop %v584
  %586 = vst.msk [vmem:[%s275] sm:$0xff] %vm124, %v585
  %v587 = vld [vmem:[%s277] sm:$0xff]
  %v589 = vsel %vm124, %v585, 0
  %591 = vmatpush.msra.mxu0 0.0
  %592 = vmatpush.msra.mxu0 0.0
  %593 = vmatpush.msra.mxu0 0.0
  %594 = vmatpush.msra.mxu0 0.0
  %595 = vmatpush.msra.mxu0 0.0
  %596 = vmatpush.msra.mxu0 0.0
  %597 = vmatpush.msra.mxu0 0.0
  %598 = vmatpush.msra.mxu0 0.0
  %599 = vmatpush.msra.mxu0 0.0
  %600 = vmatpush.msra.mxu0 0.0
  %601 = vmatpush.msra.mxu0 0.0
  %602 = vmatpush.msra.mxu0 0.0
  %603 = vmatpush.msra.mxu0 %v372
  %604 = vmatpush.msra.mxu0 %v371
  %605 = vmatpush.msra.mxu0 %v370
  %606 = vmatpush.msra.mxu0 %v369
  %607 = vmatmul.f32.gmra.mxu0 %v589
  %v608 = vpop.f32.mrf.mxu0
  %v609 = vadd.f32 0.0, %v608
  %610 = vdwg.mxu0
  %v611 = vadd.f32 %v587, %v609
  %v612 = vtanh.pop %v611
  %613 = vst.msk [vmem:[%s304] sm:$0xff] %vm124, %v612
  %v614 = vld [vmem:[%s306] sm:$0xff]
  %v616 = vsel %vm124, %v612, 0
  %618 = vmatpush.msra.mxu0 0.0
  %619 = vmatpush.msra.mxu0 0.0
  %620 = vmatpush.msra.mxu0 0.0
  %621 = vmatpush.msra.mxu0 0.0
  %622 = vmatpush.msra.mxu0 0.0
  %623 = vmatpush.msra.mxu0 0.0
  %624 = vmatpush.msra.mxu0 0.0
  %625 = vmatpush.msra.mxu0 0.0
  %626 = vmatpush.msra.mxu0 0.0
  %627 = vmatpush.msra.mxu0 0.0
  %628 = vmatpush.msra.mxu0 0.0
  %629 = vmatpush.msra.mxu0 0.0
  %630 = vmatpush.msra.mxu0 %v372
  %631 = vmatpush.msra.mxu0 %v371
  %632 = vmatpush.msra.mxu0 %v370
  %633 = vmatpush.msra.mxu0 %v369
  %634 = vmatmul.f32.gmra.mxu0 %v616
  %v635 = vpop.f32.mrf.mxu0
  %v636 = vadd.f32 0.0, %v635
  %637 = vdwg.mxu0
  %v638 = vadd.f32 %v614, %v636
  %v639 = vtanh.pop %v638
  %640 = vst.msk [vmem:[%s333] sm:$0xff] %vm124, %v639
  %v641 = vld [vmem:[%s335] sm:$0xff]
  %v643 = vsel %vm124, %v639, 0
  %645 = vmatpush.msra.mxu0 0.0
  %646 = vmatpush.msra.mxu0 0.0
  %647 = vmatpush.msra.mxu0 0.0
  %648 = vmatpush.msra.mxu0 0.0
  %649 = vmatpush.msra.mxu0 0.0
  %650 = vmatpush.msra.mxu0 0.0
  %651 = vmatpush.msra.mxu0 0.0
  %652 = vmatpush.msra.mxu0 0.0
  %653 = vmatpush.msra.mxu0 0.0
  %654 = vmatpush.msra.mxu0 0.0
  %655 = vmatpush.msra.mxu0 0.0
  %656 = vmatpush.msra.mxu0 0.0
  %657 = vmatpush.msra.mxu0 %v372
  %658 = vmatpush.msra.mxu0 %v371
  %659 = vmatpush.msra.mxu0 %v370
  %660 = vmatpush.msra.mxu0 %v369
  %661 = vmatmul.f32.gmra.mxu0 %v643
  %v662 = vpop.f32.mrf.mxu0
  %v663 = vadd.f32 0.0, %v662
  %664 = vdwg.mxu0
  %v665 = vadd.f32 %v641, %v663
  %v666 = vtanh.pop %v665
  %667 = vst.msk [vmem:[%s362] sm:$0xff] %vm124, %v666
  %s668 = scalar_lea.vmem %s11, 8
  %669 = vst.msk [vmem:[%s668] sm:$0xff] %vm124, %v666
  %v670 = vld [vmem:[#allocation3] sm:$0xff]
  %v671 = vld [vmem:[#allocation3 + $0x8] sm:$0xff]
  %v672 = vld [vmem:[#allocation3 + $0x10] sm:$0xff]
  %v673 = vld [vmem:[#allocation3 + $0x18] sm:$0xff]
  %v674 = vld [vmem:[#allocation3 + $0x20] sm:$0xff]
  %v675 = vld [vmem:[#allocation3 + $0x28] sm:$0xff]
  %v676 = vld [vmem:[#allocation3 + $0x30] sm:$0xff]
  %v677 = vld [vmem:[#allocation3 + $0x38] sm:$0xff]
  %v678 = vpack.c.bf16 %v671, %v670
  %v679 = vpack.c.bf16 %v673, %v672
  %v680 = vpack.c.bf16 %v675, %v674
  %v681 = vpack.c.bf16 %v677, %v676
  %v682 = vld [vmem:[%s8] sm:$0xf]
  %v683 = vld [vmem:[%s8 + $0x4] sm:$0xf]
  %v684 = vld [vmem:[%s8 + $0x8] sm:$0xf]
  %v685 = vld [vmem:[%s8 + $0xc] sm:$0xf]
  %v686 = vld [vmem:[%s9] sm:$0x1]
  %v688 = vperm.slane %v686, 0
  %v694 = vunpack.c.l.b16 %v682
  %v695 = vunpack.c.l.b16 %v683
  %v696 = vunpack.c.l.b16 %v684
  %v697 = vunpack.c.l.b16 %v685
  %v698 = vpack.c.b16 %v695, %v694
  %v699 = vpack.c.b16 %v697, %v696
  %v703 = vsel %vm124, %v678, 0
  %v706 = vsel %vm124, %v679, 0
  %v709 = vsel %vm124, %v680, 0
  %v712 = vsel %vm124, %v681, 0
  %714 = vmatpush.bf16.msra.mxu0 0
  %715 = vmatpush.bf16.msra.mxu0 0
  %716 = vmatpush.bf16.msra.mxu0 0
  %717 = vmatpush.bf16.msra.mxu0 0
  %718 = vmatpush.bf16.msra.mxu0 0
  %719 = vmatpush.bf16.msra.mxu0 0
  %720 = vmatpush.bf16.msra.mxu0 %v699
  %721 = vmatpush.bf16.msra.mxu0 %v698
  %722 = vmatmul.bf16.gmra.mxu0 %v703
  %v723 = vpop.f32.mrf.mxu0
  %v724 = vadd.f32 %v688, %v723
  %v725 = vpop.f32.mrf.mxu0
  %v726 = vadd.f32 %v688, %v725
  %727 = vmatmul.bf16.gmra.mxu0 %v706
  %v728 = vpop.f32.mrf.mxu0
  %v729 = vadd.f32 %v688, %v728
  %v730 = vpop.f32.mrf.mxu0
  %v731 = vadd.f32 %v688, %v730
  %732 = vmatmul.bf16.gmra.mxu0 %v709
  %v733 = vpop.f32.mrf.mxu0
  %v734 = vadd.f32 %v688, %v733
  %v735 = vpop.f32.mrf.mxu0
  %v736 = vadd.f32 %v688, %v735
  %737 = vmatmul.bf16.gmra.mxu0 %v712
  %v738 = vpop.f32.mrf.mxu0
  %v739 = vadd.f32 %v688, %v738
  %v740 = vpop.f32.mrf.mxu0
  %v741 = vadd.f32 %v688, %v740
  %742 = vdwg.mxu0
  %743 = vst [vmem:[%s10] sm:$0xff] %v724
  %744 = vst [vmem:[%s10 + $0x8] sm:$0xff] %v726
  %745 = vst [vmem:[%s10 + $0x10] sm:$0xff] %v729
  %746 = vst [vmem:[%s10 + $0x18] sm:$0xff] %v731
  %747 = vst [vmem:[%s10 + $0x20] sm:$0xff] %v734
  %748 = vst [vmem:[%s10 + $0x28] sm:$0xff] %v736
  %749 = vst [vmem:[%s10 + $0x30] sm:$0xff] %v739
  %750 = vst [vmem:[%s10 + $0x38] sm:$0xff] %v741
  // Predicated region
  $region42: #{_fused_forward.1} parent=0 // pred_check
    _
  $region43: #{_fused_forward.1} parent=0 // pred_check_branch
    %752 = sbr.rel (0) target = $region45
  $region44: #{_fused_forward.1} parent=0 // pred_region
    _
  $region45: #{_fused_forward.1} parent=0 // pred_fallthru
    _
  // Predicated region
  $region46: #{_fused_forward.1} parent=0 // pred_check
    _
  $region47: #{_fused_forward.1} parent=0 // pred_check_branch
    %754 = sbr.rel (0) target = $region49
  $region48: #{_fused_forward.1} parent=0 // pred_region
    _
  $region49: #{_fused_forward.1} parent=0 // pred_fallthru
    _
  // Predicated region
  $region50: #{_fused_forward.1} parent=0 // pred_check
    _
  $region51: #{_fused_forward.1} parent=0 // pred_check_branch
    %756 = sbr.rel (0) target = $region53
  $region52: #{_fused_forward.1} parent=0 // pred_region
    _
  $region53: #{_fused_forward.1} parent=0 // pred_fallthru
    _
  // Predicated region
  $region54: #{_fused_forward.1} parent=0 // pred_check
    _
  $region55: #{_fused_forward.1} parent=0 // pred_check_branch
    %758 = sbr.rel (0) target = $region57
  $region56: #{_fused_forward.1} parent=0 // pred_region
    _
  $region57: #{_fused_forward.1} parent=0 // pred_fallthru
    _

</llo_original>
